<compile_context>
chip_gen: v7x
topology: tpu7x:2x2x1
jax: 0.10.0
libtpu: 0.0.40
codegen_flags: <defaults>
</compile_context>

<pallas_src>
from functools import partial

import jax
import jax.numpy as jnp
from jax import lax
from jax.experimental import pallas as pl
from jax.experimental.pallas import tpu as pltpu

IGNORE_LABEL = 255

# Sanity ceiling on the lane tile (bounds Mosaic's per-op unroll for tiny C
# while still giving multi-MB, multi-microsecond DMAs per grid step).
_MAX_TILE_LANES = 128 * 1024


def _ce_kernel(score_ref, target_ref, out_ref, *, hw, ignore_label):
    """score_ref: (C, T) logits (native dtype); target_ref: (1, T) int;
    out_ref: (8, 128) f32 partial [sum, count] tile private to this step."""
    j = pl.program_id(1)

    x = score_ref[...]                                    # (C, T) native dtype
    tgt = target_ref[...].astype(jnp.int32)               # (1, T)
    c, t = x.shape

    # Validity: real pixel (covers Pallas edge-block garbage in the last lane
    # tile -- the array is NOT padded in HBM) AND not the ignore label.
    # Everything downstream of garbage columns is dropped by the
    # where(valid, ...) select below -- do NOT reorder the sum before it.
    pos = j * t + lax.broadcasted_iota(jnp.int32, (1, t), 1)
    valid = (pos < hw) & (tgt != ignore_label)             # (1, T) bool

    # Target-class logit via one-hot select on the *native* dtype block
    # (selection + adds-with-0.0 are bit-exact; bf16 packs 2/lane on v6e/v7x).
    cls = lax.broadcasted_iota(jnp.int32, (c, t), 0)
    onehot = jnp.where(cls == tgt, x, jnp.zeros((), x.dtype))
    tgt_logit = jnp.sum(onehot, axis=0, keepdims=True).astype(jnp.float32)

    # Max-stabilized logsumexp: max is exact selection in native dtype; only
    # the subtract/exp/log path runs in f32 (keep it there for accuracy).
    m = jnp.max(x, axis=0, keepdims=True).astype(jnp.float32)      # (1, T)
    ex = jnp.exp(x.astype(jnp.float32) - m)                          # (C, T)
    lse = m + jnp.log(jnp.sum(ex, axis=0, keepdims=True))            # (1, T)

    per_px = jnp.where(valid, lse - tgt_logit, 0.0)         # (1, T)
    blk_sum = jnp.sum(per_px)
    blk_cnt = jnp.sum(valid.astype(jnp.float32))            # exact: <= T < 2^24

    # (sum, count) into sublanes 0 / 1 of this block's private output tile.
    sub = lax.broadcasted_iota(jnp.int32, (8, 128), 0)
    out_ref[...] = jnp.where(sub == 0, blk_sum,
                             jnp.where(sub == 1, blk_cnt, 0.0))


def _vmem_capacity_bytes():
    try:
        cap = getattr(pltpu.get_tpu_info(), "vmem_capacity_bytes", None)
        if cap:
            return int(cap)
    except Exception:
        pass
    return 64 << 20   # conservative default (v7x per-TensorCore VMEM)


def cross_entropy_pallas(score, target, ignore_label=IGNORE_LABEL):
    """score: (N, C, H, W) float; target: (N, H, W) int. Returns scalar mean
    loss, matching nn.CrossEntropyLoss(ignore_index=ignore_label) (mean over
    valid pixels; all-ignored input gives NaN, same as PyTorch)."""
    N, C, H, W = score.shape
    HW = H * W

    # Free reshapes of the contiguous NCHW layout -- no transpose, no copy.
    score_3d = score.reshape(N, C, HW)
    # Targets stream in their native narrow integer dtype (widened in-kernel);
    # only unsupported dtypes (e.g. int8/int64/float) get converted.
    if target.dtype in (jnp.dtype(jnp.uint8), jnp.dtype(jnp.int16),
                        jnp.dtype(jnp.uint16), jnp.dtype(jnp.int32),
                        jnp.dtype(jnp.uint32)):
        target_3d = target.reshape(N, 1, HW)
    else:
        target_3d = target.astype(jnp.int32).reshape(N, 1, HW)

    score_isz = jnp.dtype(score.dtype).itemsize
    tgt_isz = jnp.dtype(target_3d.dtype).itemsize

    # ---- Generation-aware pixel-tile sizing --------------------------------
    vmem_cap = _vmem_capacity_bytes()
    # Per-grid-step scoped-VMEM budget with headroom: v7x (64 MiB physical)
    # ~20 MiB; v5e/v6e (128 MiB physical) ~48 MiB.
    budget = (20 << 20) if vmem_cap <= (64 << 20) else (48 << 20)
    # Live bytes per pixel column: 2x double-buffered input (+target) blocks,
    # plus in-kernel temporaries (native x / one-hot copies, f32 shifted and
    # exp arrays, int32 class iota).
    per_px_live = 2 * (C * score_isz + tgt_isz) + C * (2 * score_isz + 12)
    max_tile = max(128, (budget // per_px_live) // 128 * 128)

    HW_ceil = ((HW + 127) // 128) * 128     # lane-aligned bound (no array pad)
    tile_hw = min(HW_ceil, max_tile, _MAX_TILE_LANES)

    # Keep >= ~8 parallel grid steps when the problem is big enough (v7x
    # shards them over its 2 TensorCores), but never shrink a tile below
    # 1024 lanes (per-step DMA must dwarf the ~0.35 us step overhead).
    desired_steps = 8
    if N < desired_steps:
        per_batch_tiles = -(-desired_steps // N)            # ceil
        tile_cap = (HW_ceil // per_batch_tiles) // 128 * 128
        if tile_cap >= 1024:
            tile_hw = min(tile_hw, tile_cap)

    n_hw = pl.cdiv(HW, tile_hw)

    # Explicit scoped-VMEM limit sized to the actual footprint (clamped below
    # the physical capacity minus headroom).
    expected_vmem = per_px_live * tile_hw + 2 * 8 * 128 * 4 + (2 << 20)
    vmem_limit = int(min(vmem_cap - (8 << 20), max(expected_vmem, 32 << 20)))

    cost = pl.CostEstimate(
        flops=int(6 * N * C * HW),
        transcendentals=int(N * HW * (C + 1)),
        bytes_accessed=int(score_3d.size * score_isz
                           + target_3d.size * tgt_isz
                           + N * n_hw * 8 * 128 * 4),
    )

    kernel = partial(_ce_kernel, hw=HW, ignore_label=ignore_label)

    partials = pl.pallas_call(
        kernel,
        out_shape=jax.ShapeDtypeStruct((N, n_hw, 8, 128), jnp.float32),
        grid_spec=pltpu.PrefetchScalarGridSpec(
            num_scalar_prefetch=0,
            grid=(N, n_hw),
            in_specs=[
                pl.BlockSpec((None, C, tile_hw), lambda n, j: (n, 0, j)),
                pl.BlockSpec((None, 1, tile_hw), lambda n, j: (n, 0, j)),
            ],
            out_specs=pl.BlockSpec((None, None, 8, 128),
                                   lambda n, j: (n, j, 0, 0)),
        ),
        compiler_params=pltpu.CompilerParams(
            dimension_semantics=("parallel", "parallel"),
            vmem_limit_bytes=vmem_limit),
        cost_estimate=cost,
    )(score_3d, target_3d)

    sums = partials[:, :, 0, 0]                        # (N, n_hw)
    cnts = partials[:, :, 1, 0]                        # (N, n_hw)
    total_cnt = jnp.sum(cnts.astype(jnp.int32))        # exact integer count
    # All-ignored input gives 0/0 = NaN (PyTorch behavior).
    return jnp.sum(sums) / total_cnt.astype(jnp.float32)


def cross_entropy_ref(score, target, ignore_label=IGNORE_LABEL):
    """Pure-JAX reference matching nn.CrossEntropyLoss(ignore_index=255)."""
    N, C, H, W = score.shape
    logits = jnp.transpose(score, (0, 2, 3, 1)).reshape(-1, C).astype(jnp.float32)
    tgt = target.reshape(-1).astype(jnp.int32)
    lse = jax.scipy.special.logsumexp(logits, axis=-1)
    tgt_clamped = jnp.clip(tgt, 0, C - 1)
    tgt_logit = jnp.take_along_axis(logits, tgt_clamped[:, None], axis=-1)[:, 0]
    valid = tgt != ignore_label
    loss = jnp.where(valid, lse - tgt_logit, 0.0)
    return jnp.sum(loss) / jnp.sum(valid.astype(jnp.float32))


if __name__ == "__main__":
    key = jax.random.PRNGKey(0)
    k1, k2, k3 = jax.random.split(key, 3)

    # Primary test: f32, lane-aligned spatial size.
    N, C, H, W = 2, 4, 16, 16
    score = jax.random.normal(k1, (N, C, H, W), jnp.float32)
    target = jax.random.randint(k2, (N, H, W), 0, C).astype(jnp.int32)
    ignore_mask = jax.random.uniform(k3, (N, H, W)) < 0.1
    target = jnp.where(ignore_mask, IGNORE_LABEL, target)

    loss = jax.block_until_ready(cross_entropy_pallas(score, target))
    ref = cross_entropy_ref(score, target)
    assert jnp.allclose(loss, ref, rtol=1e-5, atol=1e-5), (loss, ref)

    # bf16 input path (native-dtype max / one-hot select, f32 exp path).
    score_bf16 = score.astype(jnp.bfloat16)
    loss_bf = jax.block_until_ready(cross_entropy_pallas(score_bf16, target))
    ref_bf = cross_entropy_ref(score_bf16.astype(jnp.float32), target)
    assert jnp.allclose(loss_bf, ref_bf, rtol=1e-4, atol=1e-4), (loss_bf, ref_bf)

    # Non-lane-aligned spatial size (exercises the no-pad edge-block + mask
    # path: garbage lanes are confined to masked columns).
    H2, W2 = 10, 10
    score2 = jax.random.normal(k1, (N, C, H2, W2), jnp.float32)
    target2 = jax.random.randint(k2, (N, H2, W2), 0, C).astype(jnp.int32)
    loss2 = jax.block_until_ready(cross_entropy_pallas(score2, target2))
    ref2 = cross_entropy_ref(score2, target2)
    assert jnp.allclose(loss2, ref2, rtol=1e-5, atol=1e-5), (loss2, ref2)

    print("KERNEL_OK")
</pallas_src>

<mosaic_0001>
module attributes {stable_mosaic.version = 11 : i64} {
  func.func @_ce_kernel(%arg0: i32, %arg1: i32, %arg2: memref<1x4x256xf32, #tpu.memory_space<vmem>>, %arg3: memref<1x1x256xi32, #tpu.memory_space<vmem>>, %arg4: memref<1x1x8x128xf32, #tpu.memory_space<vmem>>) attributes {dimension_semantics = [#tpu.dimension_semantics<parallel>, #tpu.dimension_semantics<parallel>], iteration_bounds = array<i64: 2, 1>, scalar_prefetch = 0 : i64, scratch_operands = 0 : i64, tpu.core_type = #tpu.core_type<tc>, window_params = [{transform_indices = @transform_0, window_bounds = array<i64: 1, 4, 256>}, {transform_indices = @transform_1, window_bounds = array<i64: 1, 1, 256>}, {transform_indices = @transform_2, window_bounds = array<i64: 1, 1, 8, 128>}]} {
    %c0 = arith.constant 0 : index
    %c0_0 = arith.constant 0 : index
    %c0_1 = arith.constant 0 : index
    %0 = vector.load %arg2[%c0, %c0_0, %c0_1] : memref<1x4x256xf32, #tpu.memory_space<vmem>>, vector<1x4x256xf32>
    %1 = vector.shape_cast %0 : vector<1x4x256xf32> to vector<4x256xf32>
    %c0_2 = arith.constant 0 : index
    %c0_3 = arith.constant 0 : index
    %c0_4 = arith.constant 0 : index
    %2 = vector.load %arg3[%c0_2, %c0_3, %c0_4] : memref<1x1x256xi32, #tpu.memory_space<vmem>>, vector<1x1x256xi32>
    %3 = vector.shape_cast %2 : vector<1x1x256xi32> to vector<1x256xi32>
    %c256_i32 = arith.constant 256 : i32
    %4 = arith.muli %arg1, %c256_i32 : i32
    %5 = tpu.iota {dimensions = array<i32: 1>} : vector<1x256xi32>
    %6 = vector.broadcast %4 : i32 to vector<1x256xi32>
    %7 = arith.addi %6, %5 : vector<1x256xi32>
    %c256_i32_5 = arith.constant 256 : i32
    %8 = vector.broadcast %c256_i32_5 : i32 to vector<1x256xi32>
    %9 = arith.cmpi slt, %7, %8 : vector<1x256xi32>
    %c255_i32 = arith.constant 255 : i32
    %10 = vector.broadcast %c255_i32 : i32 to vector<1x256xi32>
    %11 = arith.cmpi ne, %3, %10 : vector<1x256xi32>
    %12 = arith.andi %9, %11 : vector<1x256xi1>
    %13 = tpu.iota {dimensions = array<i32: 0>} : vector<4x256xi32>
    %14 = vector.broadcast %3 : vector<1x256xi32> to vector<4x256xi32>
    %15 = arith.cmpi eq, %13, %14 : vector<4x256xi32>
    %cst = arith.constant 0.000000e+00 : f32
    %16 = vector.broadcast %cst : f32 to vector<4x256xf32>
    %17 = arith.select %15, %1, %16 : vector<4x256xi1>, vector<4x256xf32>
    %cst_6 = arith.constant dense<0.000000e+00> : vector<256xf32>
    %18 = vector.multi_reduction <add>, %17, %cst_6 [0] : vector<4x256xf32> to vector<256xf32>
    %19 = vector.shape_cast %18 : vector<256xf32> to vector<1x256xf32>
    %cst_7 = arith.constant dense<0xFF800000> : vector<256xf32>
    %20 = vector.multi_reduction <maximumf>, %1, %cst_7 [0] : vector<4x256xf32> to vector<256xf32>
    %21 = vector.shape_cast %20 : vector<256xf32> to vector<1x256xf32>
    %22 = vector.broadcast %21 : vector<1x256xf32> to vector<4x256xf32>
    %23 = arith.subf %1, %22 : vector<4x256xf32>
    %24 = math.exp %23 : vector<4x256xf32>
    %cst_8 = arith.constant dense<0.000000e+00> : vector<256xf32>
    %25 = vector.multi_reduction <add>, %24, %cst_8 [0] : vector<4x256xf32> to vector<256xf32>
    %26 = vector.shape_cast %25 : vector<256xf32> to vector<1x256xf32>
    %27 = math.log %26 : vector<1x256xf32>
    %28 = arith.addf %21, %27 : vector<1x256xf32>
    %29 = arith.subf %28, %19 : vector<1x256xf32>
    %cst_9 = arith.constant 0.000000e+00 : f32
    %30 = vector.broadcast %cst_9 : f32 to vector<1x256xf32>
    %31 = arith.select %12, %29, %30 : vector<1x256xi1>, vector<1x256xf32>
    %32 = vector.shape_cast %31 : vector<1x256xf32> to vector<1x1x256xf32>
    %cst_10 = arith.constant dense<0.000000e+00> : vector<1xf32>
    %33 = vector.multi_reduction <add>, %32, %cst_10 [1, 2] : vector<1x1x256xf32> to vector<1xf32>
    %34 = vector.shape_cast %33 : vector<1xf32> to vector<1x1x1xf32>
    %35 = vector.extract %34[0, 0, 0] : f32 from vector<1x1x1xf32>
    %36 = arith.extui %12 : vector<1x256xi1> to vector<1x256xi32>
    %37 = arith.sitofp %36 : vector<1x256xi32> to vector<1x256xf32>
    %38 = vector.shape_cast %37 : vector<1x256xf32> to vector<1x1x256xf32>
    %cst_11 = arith.constant dense<0.000000e+00> : vector<1xf32>
    %39 = vector.multi_reduction <add>, %38, %cst_11 [1, 2] : vector<1x1x256xf32> to vector<1xf32>
    %40 = vector.shape_cast %39 : vector<1xf32> to vector<1x1x1xf32>
    %41 = vector.extract %40[0, 0, 0] : f32 from vector<1x1x1xf32>
    %42 = tpu.iota {dimensions = array<i32: 0>} : vector<8x128xi32>
    %c0_i32 = arith.constant 0 : i32
    %43 = vector.broadcast %c0_i32 : i32 to vector<8x128xi32>
    %44 = arith.cmpi eq, %42, %43 : vector<8x128xi32>
    %c1_i32 = arith.constant 1 : i32
    %45 = vector.broadcast %c1_i32 : i32 to vector<8x128xi32>
    %46 = arith.cmpi eq, %42, %45 : vector<8x128xi32>
    %cst_12 = arith.constant 0.000000e+00 : f32
    %47 = vector.broadcast %41 : f32 to vector<8x128xf32>
    %48 = vector.broadcast %cst_12 : f32 to vector<8x128xf32>
    %49 = arith.select %46, %47, %48 : vector<8x128xi1>, vector<8x128xf32>
    %50 = vector.broadcast %35 : f32 to vector<8x128xf32>
    %51 = arith.select %44, %50, %49 : vector<8x128xi1>, vector<8x128xf32>
    %c0_13 = arith.constant 0 : index
    %c0_14 = arith.constant 0 : index
    %c0_15 = arith.constant 0 : index
    %c0_16 = arith.constant 0 : index
    %52 = vector.load %arg4[%c0_13, %c0_14, %c0_15, %c0_16] : memref<1x1x8x128xf32, #tpu.memory_space<vmem>>, vector<1x1x8x128xf32>
    %53 = vector.shape_cast %52 : vector<1x1x8x128xf32> to vector<8x128xf32>
    %54 = vector.shape_cast %51 : vector<8x128xf32> to vector<1x1x8x128xf32>
    tpu.vector_store %arg4[%c0_13, %c0_14, %c0_15, %c0_16], %54 {strides = array<i32>} : memref<1x1x8x128xf32, #tpu.memory_space<vmem>>, vector<1x1x8x128xf32>,
    return
  }
  func.func @transform_0(%arg0: i32, %arg1: i32) -> (i32, i32, i32) {
    %c0_i32 = arith.constant 0 : i32
    %c0_i32_0 = arith.constant 0 : i32
    return %arg0, %c0_i32, %arg1 : i32, i32, i32
  }
  func.func @transform_1(%arg0: i32, %arg1: i32) -> (i32, i32, i32) {
    %c0_i32 = arith.constant 0 : i32
    %c0_i32_0 = arith.constant 0 : i32
    return %arg0, %c0_i32, %arg1 : i32, i32, i32
  }
  func.func @transform_2(%arg0: i32, %arg1: i32) -> (i32, i32, i32, i32) {
    %c0_i32 = arith.constant 0 : i32
    %c0_i32_0 = arith.constant 0 : i32
    %c0_i32_1 = arith.constant 0 : i32
    return %arg0, %arg1, %c0_i32, %c0_i32_0 : i32, i32, i32, i32
  }
}

</mosaic_0001>

<llo_original>
// kernel: tpu_custom_call.1
$region0: #{tpu_custom_call.1}
  #allocation0 [shape = 'u32[]', space=smem, size = 0x4, offset = 0x4, fixed_abs, tag = 'smem constant byte address 0x4 - core index']
  #allocation1 [shape = 'u32[144,128]{1,0:T(1,128)}', space=vmem, size = 0x12000, scoped, tag = 'internal scratch']
  %s0 = inlined_call_operand.hbm [shape: f32[2,4,256], index: 0, kind: input, shape index: {}]
  %s1 = inlined_call_operand.hbm [shape: s32[2,1,256], index: 1, kind: input, shape index: {}]
  %s2 = inlined_call_operand.hbm [shape: f32[2,1,8,128], index: 2, kind: output, shape index: {}]
  %s3 = sld [smem:[#allocation0]]
  $region49: #{tpu_custom_call.1} parent=0
    _
  %s5 = ssub.s32 1, %s3
  %s6 = scalar_select 0, %s5, %s3
  $region1: #{tpu_custom_call.1} parent=0
    #allocation2 [shape = 'u8[8192]{0}', space=vmem, size = 0x2000, scoped, tag = 'input window, operand 0']
    #allocation3 [shape = 's32[2]{0}', space=sflag, size = 0x8, scoped, tag = 'scoped memory for tpu_custom_call.1']
    #allocation4 [shape = 's32[2]{0}', space=sflag, size = 0x8, scoped, tag = 'scoped memory for tpu_custom_call.1']
    #allocation5 [shape = 'u8[2048]{0}', space=vmem, size = 0x800, scoped, tag = 'input window, operand 1']
    #allocation6 [shape = 's32[2]{0}', space=sflag, size = 0x8, scoped, tag = 'scoped memory for tpu_custom_call.1']
    #allocation7 [shape = 'u8[8192]{0}', space=vmem, size = 0x2000, scoped, tag = 'output window, operand 0']
    %7 = vsyncpa [#allocation3], 0
    %s8 = scalar_lea.sflag [#allocation3], 1
    %9 = vsyncpa %s8, 0
    %10 = vsyncpa [#allocation6], 0
    %s11 = scalar_lea.sflag [#allocation6], 1
    %12 = vsyncpa %s11, 0
    %13 = vsyncpa [#allocation4], 0
    %s14 = scalar_lea.sflag [#allocation4], 1
    %15 = vsyncpa %s14, 0
    loop: start=0, step=1, limit=4
    $region2: #{tpu_custom_call.1} parent=1 // loop_pre_header
      _
    $region3: #{tpu_custom_call.1} parent=1 // loop_header
      %s17 = sphi 0, %s21
      %p18 = scmp.ge.s32.totalorder %s17, 4
      %s24 = sphi 0, %s36
      %s25 = sphi 0, %s32
      %s26 = sphi 0, %s24
      %s27 = sphi 0, %s25
      %s28 = sphi 0, %s26
      %s29 = sphi 0, %s27
      %s41 = sphi 0, %s43
      %s44 = sphi 0, %s41
      %s45 = sphi 0, %s44
      %s61 = sphi 0, %s45
      %s69 = sphi 0, %s71
      %s72 = sphi 0, %s69
      %s73 = sphi 0, %s72
      %s89 = sphi 0, %s73
      %s97 = sphi 0, %s99
      %s100 = sphi 0, %s97
      %s101 = sphi 0, %s100
      %s117 = sphi 0, %s101
    $region4: #{tpu_custom_call.1} parent=1 // loop_header_branch
      %20 = sbr.rel (%p18) target = $region8
    $region5: #{tpu_custom_call.1} parent=1 // loop_body
      %s22 = ssub.s32 %s17, 1
      %s23 = ssub.s32 %s17, 2
      %s30 = sadd.s32 1, %s25
      %p31 = scmp.ge.s32.totalorder %s30, 1
      %s32 = scalar_select %p31, 0, %s30
      %s33 = sadd.s32 1, %s24
      %s34 = scalar_select %p31, %s33, %s24
      %p35 = scmp.ge.s32.totalorder %s34, 2
      %s36 = scalar_select %p35, 0, %s34
      %s37 = ssub.s32 %s24, %s36
      %s38 = ssub.s32 %s25, %s32
      %s39 = sor.u32 %s37, %s38
      %p40 = scmp.eq.s32.totalorder %s39, 0
      %s42 = sadd.s32 %s41, 1
      %s43 = scalar_select %p40, %s41, %s42
      %p46 = pneg %p40
      %p47 = scmp.eq.s32.totalorder %s17, 1
      %p48 = por %p46, %p47
      %p49 = scmp.ne.s32.totalorder %s41, %s44
      %p50 = scmp.eq.s32.totalorder %s17, 0
      %p51 = por %p49, %p50
      %p52 = scmp.ne.s32.totalorder %s41, %s44
      %p53 = scmp.eq.s32.totalorder %s22, 1
      %p54 = por %p52, %p53
      %p55 = scmp.ne.s32.totalorder %s44, %s45
      %p56 = scmp.eq.s32.totalorder %s22, 0
      %p57 = por %p55, %p56
      %p58 = scmp.ne.s32.totalorder %s44, %s45
      %p59 = scmp.eq.s32.totalorder %s23, 1
      %p60 = por %p58, %p59
      %p62 = scmp.ne.s32.totalorder %s45, %s61
      %p63 = scmp.eq.s32.totalorder %s23, 0
      %p64 = por %p62, %p63
      %s65 = ssub.s32 %s24, %s36
      %s66 = ssub.s32 %s25, %s32
      %s67 = sor.u32 %s65, %s66
      %p68 = scmp.eq.s32.totalorder %s67, 0
      %s70 = sadd.s32 %s69, 1
      %s71 = scalar_select %p68, %s69, %s70
      %p74 = pneg %p68
      %p75 = scmp.eq.s32.totalorder %s17, 1
      %p76 = por %p74, %p75
      %p77 = scmp.ne.s32.totalorder %s69, %s72
      %p78 = scmp.eq.s32.totalorder %s17, 0
      %p79 = por %p77, %p78
      %p80 = scmp.ne.s32.totalorder %s69, %s72
      %p81 = scmp.eq.s32.totalorder %s22, 1
      %p82 = por %p80, %p81
      %p83 = scmp.ne.s32.totalorder %s72, %s73
      %p84 = scmp.eq.s32.totalorder %s22, 0
      %p85 = por %p83, %p84
      %p86 = scmp.ne.s32.totalorder %s72, %s73
      %p87 = scmp.eq.s32.totalorder %s23, 1
      %p88 = por %p86, %p87
      %p90 = scmp.ne.s32.totalorder %s73, %s89
      %p91 = scmp.eq.s32.totalorder %s23, 0
      %p92 = por %p90, %p91
      %s93 = ssub.s32 %s24, %s36
      %s94 = ssub.s32 %s25, %s32
      %s95 = sor.u32 %s93, %s94
      %p96 = scmp.eq.s32.totalorder %s95, 0
      %s98 = sadd.s32 %s97, 1
      %s99 = scalar_select %p96, %s97, %s98
      %p102 = pneg %p96
      %p103 = scmp.eq.s32.totalorder %s17, 1
      %p104 = por %p102, %p103
      %p105 = scmp.ne.s32.totalorder %s97, %s100
      %p106 = scmp.eq.s32.totalorder %s17, 0
      %p107 = por %p105, %p106
      %p108 = scmp.ne.s32.totalorder %s97, %s100
      %p109 = scmp.eq.s32.totalorder %s22, 1
      %p110 = por %p108, %p109
      %p111 = scmp.ne.s32.totalorder %s100, %s101
      %p112 = scmp.eq.s32.totalorder %s22, 0
      %p113 = por %p111, %p112
      %p114 = scmp.ne.s32.totalorder %s100, %s101
      %p115 = scmp.eq.s32.totalorder %s23, 1
      %p116 = por %p114, %p115
      %p118 = scmp.ne.s32.totalorder %s101, %s117
      %p119 = scmp.eq.s32.totalorder %s23, 0
      %p120 = por %p118, %p119
      %p121 = scmp.le.s32.totalorder 1, %s17
      %p122 = scmp.lt.s32.totalorder %s17, 3
      %p123 = pnand %p121, %p122
      %p124 = pneg %p123
      // Predicated region
      $region9: #{tpu_custom_call.1} parent=5 // pred_check
        _
      $region10: #{tpu_custom_call.1} parent=5 // pred_check_branch
        %126 = sbr.rel (%p123) target = $region12
      $region11: #{tpu_custom_call.1} parent=5 // pred_region
        %s127 = ssub.s32 %s17, 1
      $region12: #{tpu_custom_call.1} parent=5 // pred_fallthru
        _
      %p128 = scmp.lt.s32.totalorder %s17, 2
      // Predicated region
      $region13: #{tpu_custom_call.1} parent=5 // pred_check
        %p129 = pneg %p128
      $region14: #{tpu_custom_call.1} parent=5 // pred_check_branch
        %131 = sbr.rel (%p129) target = $region16
      $region15: #{tpu_custom_call.1} parent=5 // pred_region
        // Predicated region
        $region17: #{tpu_custom_call.1} parent=15 // pred_check
          %p132 = pneg %p51
        $region18: #{tpu_custom_call.1} parent=15 // pred_check_branch
          %134 = sbr.rel (%p132) target = $region20
        $region19: #{tpu_custom_call.1} parent=15 // pred_region
          %s135 = sand.u32 %s41, 1
          %s136 = scalar_lea.sflag [#allocation3], %s135
          %s137 = sand.u32 %s41, 1
          %s138 = smul.addr %s137, 8
          %s139 = scalar_lea.vmem [#allocation2], %s138
          %s140 = smul.u32 2, %s25
          %s142 = ssub.s32 128, 128
          %143 = vsyncadd %s136, %s142
          %s144 = smul.addr %s24, 2
          %s145 = sadd.s32 %s140, %s144
          %s146 = smul.addr %s145, 64
          %s147 = scalar_lea.hbm %s0, %s146
          %s149 = sshll.u32 %s139, 4
          %s150 = int_to_ptr.vmem [resolvable:$true] %s149
          %152 = dma.hbm_to_vmem [thread:$0]  %s147, 128, %s150, %s136
        $region20: #{tpu_custom_call.1} parent=15 // pred_fallthru
          _
        // Predicated region
        $region21: #{tpu_custom_call.1} parent=15 // pred_check
          %p153 = pneg %p79
        $region22: #{tpu_custom_call.1} parent=15 // pred_check_branch
          %155 = sbr.rel (%p153) target = $region24
        $region23: #{tpu_custom_call.1} parent=15 // pred_region
          %s156 = sand.u32 %s69, 1
          %s157 = scalar_lea.sflag [#allocation6], %s156
          %s158 = sand.u32 %s69, 1
          %s159 = smul.addr %s158, 2
          %s160 = scalar_lea.vmem [#allocation5], %s159
          %s161 = smul.u32 2, %s25
          %s163 = ssub.s32 32, 32
          %164 = vsyncadd %s157, %s163
          %s165 = smul.addr %s24, 2
          %s166 = sadd.s32 %s161, %s165
          %s167 = smul.addr %s166, 16
          %s168 = scalar_lea.hbm %s1, %s167
          %s170 = sshll.u32 %s160, 4
          %s171 = int_to_ptr.vmem [resolvable:$true] %s170
          %173 = dma.hbm_to_vmem [thread:$0]  %s168, 32, %s171, %s157
        $region24: #{tpu_custom_call.1} parent=15 // pred_fallthru
          _
      $region16: #{tpu_custom_call.1} parent=5 // pred_fallthru
        _
      %p174 = scmp.le.s32.totalorder 1, %s17
      %p175 = scmp.lt.s32.totalorder %s17, 3
      %p176 = pnand %p174, %p175
      %p177 = pneg %p176
      // Predicated region
      $region25: #{tpu_custom_call.1} parent=5 // pred_check
        _
      $region26: #{tpu_custom_call.1} parent=5 // pred_check_branch
        %179 = sbr.rel (%p176) target = $region28
      $region27: #{tpu_custom_call.1} parent=5 // pred_region
        %s180 = ssub.s32 %s17, 1
        %s181 = sand.u32 %s44, 1
        %s182 = scalar_lea.sflag [#allocation3], %s181
        %s183 = sand.u32 %s44, 1
        %s184 = smul.addr %s183, 8
        %s185 = scalar_lea.vmem [#allocation2], %s184
        // Predicated region
        $region29: #{tpu_custom_call.1} parent=27 // pred_check
          %p186 = pneg %p57
        $region30: #{tpu_custom_call.1} parent=27 // pred_check_branch
          %188 = sbr.rel (%p186) target = $region32
        $region31: #{tpu_custom_call.1} parent=27 // pred_region
          %189 = dma.done %s182, 128
        $region32: #{tpu_custom_call.1} parent=27 // pred_fallthru
          _
        %s190 = sand.u32 %s72, 1
        %s191 = scalar_lea.sflag [#allocation6], %s190
        %s192 = sand.u32 %s72, 1
        %s193 = smul.addr %s192, 2
        %s194 = scalar_lea.vmem [#allocation5], %s193
        // Predicated region
        $region33: #{tpu_custom_call.1} parent=27 // pred_check
          %p195 = pneg %p85
        $region34: #{tpu_custom_call.1} parent=27 // pred_check_branch
          %197 = sbr.rel (%p195) target = $region36
        $region35: #{tpu_custom_call.1} parent=27 // pred_region
          %198 = dma.done %s191, 32
        $region36: #{tpu_custom_call.1} parent=27 // pred_fallthru
          _
        %s199 = sand.u32 %s44, 1
        %s200 = scalar_lea.sflag [#allocation3], %s199
        %s201 = sand.u32 %s44, 1
        %s202 = smul.addr %s201, 8
        %s203 = scalar_lea.vmem [#allocation2], %s202
        %p204 = pneg %p57
        %p205 = pneg %p54
        %s206 = sand.u32 %s72, 1
        %s207 = scalar_lea.sflag [#allocation6], %s206
        %s208 = sand.u32 %s72, 1
        %s209 = smul.addr %s208, 2
        %s210 = scalar_lea.vmem [#allocation5], %s209
        %p211 = pneg %p85
        %p212 = pneg %p82
        %p213 = pneg %p113
        %p214 = pneg %p110
        %s215 = sand.u32 %s100, 1
        %s216 = scalar_lea.sflag [#allocation4], %s215
        %s217 = sand.u32 %s100, 1
        %s218 = smul.addr %s217, 8
        %s219 = scalar_lea.vmem [#allocation7], %s218
        %s220 = smul.u32 2, %s27
        %s221 = smul.u32 2, %s27
        %v222 = vld [vmem:[%s185] sm:$0xff]
        %v223 = vld [vmem:[%s194] sm:$0x3]
        %s224 = smul.u32 %s27, 256
        %v225 = vlaneseq
        %v226 = vand.u32 %v225, 127
        %v227 = vadd.s32 %v226, 128
        %v228 = vstv %s224
        %v229 = vadd.s32 %v228, %v226
        %v230 = vadd.s32 %v228, %v227
        %vm231 = vcmp.lt.s32.totalorder %v229, 256
        %vm232 = vcmp.lt.s32.totalorder %v230, 256
        %vm233 = vcmp.ne.s32.totalorder %v223, 255
        %v234 = vsel %vm233, 1, 0
        %v235 = vlaneseq
        %v236 = vshrl.u32 %v235, 7
        %v237 = vsub.s32 0, %v236
        %v238 = vrot.slane %v234, %v237
        %v239 = vlaneseq
        %v240 = vshrl.u32 %v239, 7
        %v241 = vsub.s32 1, %v240
        %v242 = vrot.slane %v234, %v241
        %vm243 = vcmp.ne.s32.totalorder %v238, 0
        %vm244 = vcmp.ne.s32.totalorder %v242, 0
        %vm245 = vmand %vm231, %vm243
        %vm246 = vmand %vm232, %vm244
        %v247 = vlaneseq
        %v248 = vshrl.u32 %v247, 7
        %v249 = vlaneseq
        %v250 = vshrl.u32 %v249, 7
        %v251 = vsub.s32 0, %v250
        %v252 = vrot.slane %v223, %v251
        %v253 = vlaneseq
        %v254 = vshrl.u32 %v253, 7
        %v255 = vsub.s32 1, %v254
        %v256 = vrot.slane %v223, %v255
        %vm257 = vcmp.eq.s32.totalorder %v248, %v252
        %vm258 = vcmp.eq.s32.totalorder %v248, %v256
        %v260 = vcombine.high %v222, %v222
        %v262 = vsel %vm257, %v222, 0.0
        %v263 = vsel %vm258, %v260, 0.0
        %vm264 = vcmask 1043456
        %v265 = vsel %vm264, %v262, 0.0
        %v266 = vrot.slane %v265, 4
        %v267 = vadd.f32 %v265, %v266
        %v268 = vrot.slane %v267, 2
        %v269 = vadd.f32 %v267, %v268
        %v270 = vrot.slane %v269, 1
        %v271 = vadd.f32 %v269, %v270
        %v272 = vsel %vm264, %v263, 0.0
        %v273 = vrot.slane %v272, 4
        %v274 = vadd.f32 %v272, %v273
        %v275 = vrot.slane %v274, 2
        %v276 = vadd.f32 %v274, %v275
        %v277 = vrot.slane %v276, 1
        %v278 = vadd.f32 %v276, %v277
        %v279 = vsel %vm264, %v222, -inf
        %v280 = vrot.slane %v279, 4
        %v281 = vmax.f32 %v279, %v280
        %v282 = vrot.slane %v281, 2
        %v283 = vmax.f32 %v281, %v282
        %v284 = vrot.slane %v283, 1
        %v285 = vmax.f32 %v283, %v284
        %v286 = vsel %vm264, %v260, -inf
        %v287 = vrot.slane %v286, 4
        %v288 = vmax.f32 %v286, %v287
        %v289 = vrot.slane %v288, 2
        %v290 = vmax.f32 %v288, %v289
        %v291 = vrot.slane %v290, 1
        %v292 = vmax.f32 %v290, %v291
        %v295 = vcombine.low %v285, %v292
        %v297 = vsub.f32 %v222, %v295
        %v298 = vmul.f32 %v297, 1.442695
        %v299 = vpow.pop %v298
        %v301 = vcombine.high %v299, %v299
        %v303 = vsel %vm264, %v299, 0.0
        %v304 = vrot.slane %v303, 4
        %v305 = vadd.f32 %v303, %v304
        %v306 = vrot.slane %v305, 2
        %v307 = vadd.f32 %v305, %v306
        %v308 = vrot.slane %v307, 1
        %v309 = vadd.f32 %v307, %v308
        %v310 = vsel %vm264, %v301, 0.0
        %v311 = vrot.slane %v310, 4
        %v312 = vadd.f32 %v310, %v311
        %v313 = vrot.slane %v312, 2
        %v314 = vadd.f32 %v312, %v313
        %v315 = vrot.slane %v314, 1
        %v316 = vadd.f32 %v314, %v315
        %v317 = vlog2.pop %v309
        %v318 = vmul.f32 %v317, 0.6931472
        %v319 = vlog2.pop %v316
        %v320 = vmul.f32 %v319, 0.6931472
        %v321 = vadd.f32 %v285, %v318
        %v322 = vadd.f32 %v292, %v320
        %v323 = vsub.f32 %v321, %v271
        %v324 = vsub.f32 %v322, %v278
        %v325 = vsel %vm245, %v323, 0.0
        %v326 = vsel %vm246, %v324, 0.0
        %vm327 = vcmask 1040384
        %v328 = vsel %vm327, %v325, 0.0
        %v329 = vsel %vm327, %v326, 0.0
        %v330 = vadd.f32 %v328, %v329
        %331 = vadd.xlane.f32.xlu0 %v330
        %v332 = vpop.xlane.xlu0 %331
        %v333 = vrot.slane %v332, 4
        %v334 = vadd.f32 %v332, %v333
        %v335 = vrot.slane %v334, 2
        %v336 = vadd.f32 %v334, %v335
        %v337 = vrot.slane %v336, 1
        %v338 = vadd.f32 %v336, %v337
        %s339 = vtos %v338
        %v340 = vsel %vm245, 1, 0
        %v341 = vsel %vm246, 1, 0
        %v342 = vcvt.s32.f32 %v340
        %v343 = vcvt.s32.f32 %v341
        %v344 = vsel %vm327, %v342, 0.0
        %v345 = vsel %vm327, %v343, 0.0
        %v346 = vadd.f32 %v344, %v345
        %347 = vadd.xlane.f32.xlu0 %v346
        %v348 = vpop.xlane.xlu0 %347
        %v349 = vrot.slane %v348, 4
        %v350 = vadd.f32 %v348, %v349
        %v351 = vrot.slane %v350, 2
        %v352 = vadd.f32 %v350, %v351
        %v353 = vrot.slane %v352, 1
        %v354 = vadd.f32 %v352, %v353
        %s355 = vtos %v354
        %vm356 = vcmp.eq.s32.totalorder %v248, 0
        %vm357 = vcmp.eq.s32.totalorder %v248, 1
        %v358 = vstv %s355
        %v359 = vsel %vm357, %v358, 0.0
        %v360 = vstv %s339
        %v361 = vsel %vm356, %v360, %v359
        %362 = vst [vmem:[%s219] sm:$0xff] %v361
        %s363 = sand.u32 %s100, 1
        %s364 = scalar_lea.sflag [#allocation4], %s363
        %s365 = sand.u32 %s100, 1
        %s366 = smul.addr %s365, 8
        %s367 = scalar_lea.vmem [#allocation7], %s366
        // Predicated region
        $region37: #{tpu_custom_call.1} parent=27 // pred_check
          %p368 = pneg %p110
        $region38: #{tpu_custom_call.1} parent=27 // pred_check_branch
          %370 = sbr.rel (%p368) target = $region40
        $region39: #{tpu_custom_call.1} parent=27 // pred_region
          %s372 = ssub.s32 128, 128
          %373 = vsyncadd %s364, %s372
          %s374 = sadd.s32 %s27, %s26
          %s375 = smul.addr %s374, 128
          %s376 = scalar_lea.hbm %s2, %s375
          %s378 = sshll.u32 %s367, 4
          %s379 = int_to_ptr.vmem [resolvable:$true] %s378
          %381 = dma.vmem_to_hbm [thread:$0]  %s379, 128, %s376, %s364
        $region40: #{tpu_custom_call.1} parent=27 // pred_fallthru
          _
      $region28: #{tpu_custom_call.1} parent=5 // pred_fallthru
        _
      %p382 = scmp.le.s32.totalorder 2, %s17
      // Predicated region
      $region41: #{tpu_custom_call.1} parent=5 // pred_check
        %p383 = pneg %p382
      $region42: #{tpu_custom_call.1} parent=5 // pred_check_branch
        %385 = sbr.rel (%p383) target = $region44
      $region43: #{tpu_custom_call.1} parent=5 // pred_region
        %s386 = ssub.s32 %s17, 2
        // Predicated region
        $region45: #{tpu_custom_call.1} parent=43 // pred_check
          %p387 = pneg %p116
        $region46: #{tpu_custom_call.1} parent=43 // pred_check_branch
          %389 = sbr.rel (%p387) target = $region48
        $region47: #{tpu_custom_call.1} parent=43 // pred_region
          %s390 = sand.u32 %s101, 1
          %s391 = scalar_lea.sflag [#allocation4], %s390
          %s392 = sand.u32 %s101, 1
          %s393 = smul.addr %s392, 8
          %s394 = scalar_lea.vmem [#allocation7], %s393
          %395 = dma.done %s391, 128
        $region48: #{tpu_custom_call.1} parent=43 // pred_fallthru
          _
      $region44: #{tpu_custom_call.1} parent=5 // pred_fallthru
        _
    $region6: #{tpu_custom_call.1} parent=1 // loop_footer
      %s21 = sadd.s32 1, %s17
    $region7: #{tpu_custom_call.1} parent=1 // loop_footer_branch
      %16 = sbr.rel target = $region3
    $region8: #{tpu_custom_call.1} parent=1 // loop_exit
      _
    %396 = vsyncpa [#allocation3], 1
    %s397 = scalar_lea.sflag [#allocation3], 1
    %398 = vsyncpa %s397, 1
    %399 = vsyncpa [#allocation6], 1
    %s400 = scalar_lea.sflag [#allocation6], 1
    %401 = vsyncpa %s400, 1
    %402 = vsyncpa [#allocation4], 1
    %s403 = scalar_lea.sflag [#allocation4], 1
    %404 = vsyncpa %s403, 1

</llo_original>
